<compile_context>
chip_gen: v7x
topology: tpu7x:2x2x1
jax: 0.10.0
libtpu: 0.0.40
codegen_flags: <defaults>
</compile_context>

<pallas_src>
import jax
import jax.numpy as jnp
from jax.experimental import pallas as pl
from jax.experimental.pallas import tpu as pltpu


# -----------------------------------------------------------------------------
# Kernel body: direct HBM->HBM DMA of one chunk per grid step.
# -----------------------------------------------------------------------------
def _hbm_dma_copy_kernel(x_hbm, o_hbm, sem):
    i = pl.program_id(0)
    cp = pltpu.make_async_copy(x_hbm.at[i], o_hbm.at[i], sem)
    cp.start()
    cp.wait()


def _num_chunks(size: int) -> int:
    """Largest power of two <= 8 that evenly divides `size` (>=2 helps v7x
    megacore split the DMA issue; <=8 keeps per-step overhead negligible)."""
    n = 1
    while n < 8 and size % (n * 2) == 0:
        n *= 2
    return n


# -----------------------------------------------------------------------------
# Wrapper
# -----------------------------------------------------------------------------
def inundation_performer_station(inputs, *, materialize=False):
    """Pallas equivalent of InundationPerformerStation.forward (empty stub).

    Default: identity pass-through with zero overhead (no pallas_call, no
    buffer donation — nothing to compute, nothing to move).

    materialize=True: return a fresh (non-aliased) output buffer via a direct
    chunked HBM->HBM DMA Pallas kernel (no VMEM staging).
    """
    if not materialize:
        # Semantic note (intentional, documented): PyTorch forward() returns
        # None; identity is the only useful data contract.
        return inputs

    orig_shape = inputs.shape
    size = int(inputs.size)
    itemsize = jnp.dtype(inputs.dtype).itemsize
    if size == 0:
        return inputs

    nchunks = _num_chunks(size)
    flat = inputs.reshape(nchunks, size // nchunks)

    out_flat = pl.pallas_call(
        _hbm_dma_copy_kernel,
        out_shape=jax.ShapeDtypeStruct(flat.shape, inputs.dtype),
        grid=(nchunks,),
        in_specs=[pl.BlockSpec(memory_space=pl.ANY)],
        out_specs=pl.BlockSpec(memory_space=pl.ANY),
        scratch_shapes=[pltpu.SemaphoreType.DMA],
        compiler_params=pltpu.CompilerParams(
            dimension_semantics=("parallel",),
        ),
        cost_estimate=pl.CostEstimate(
            flops=0, transcendentals=0, bytes_accessed=2 * size * itemsize),
    )(flat)
    return out_flat.reshape(orig_shape)


# -----------------------------------------------------------------------------
# Self-test
# -----------------------------------------------------------------------------
if __name__ == "__main__":
    key = jax.random.PRNGKey(0)
    # Small shapes implied by a sequence "station": batch=2, seq=8, hidden=32.
    x = jax.random.normal(key, (2, 8, 32), dtype=jnp.float32)

    # Default (pure pass-through) path.
    out = jax.block_until_ready(inundation_performer_station(x))
    assert out.shape == x.shape and out.dtype == x.dtype
    assert jnp.allclose(out, x)

    # Materializing path: Pallas HBM->HBM DMA copy kernel.
    out2 = jax.block_until_ready(inundation_performer_station(x, materialize=True))
    assert out2.shape == x.shape and out2.dtype == x.dtype
    assert jnp.allclose(out2, x)

    # Also exercise a sub-32-bit dtype (DMA path is dtype/layout agnostic).
    xb = jax.random.normal(key, (2, 8, 48), dtype=jnp.bfloat16)
    out3 = jax.block_until_ready(inundation_performer_station(xb, materialize=True))
    assert out3.shape == xb.shape and out3.dtype == xb.dtype
    assert jnp.array_equal(out3, xb)

    print("KERNEL_OK")
</pallas_src>

<mosaic_0001>
module attributes {stable_mosaic.version = 11 : i64} {
  func.func @_hbm_dma_copy_kernel(%arg0: i32, %arg1: memref<8x64xf32, #tpu.memory_space<any>>, %arg2: memref<8x64xf32, #tpu.memory_space<any>>, %arg3: memref<!tpu.dma_semaphore, #tpu.memory_space<semaphore_mem>>) attributes {dimension_semantics = [#tpu.dimension_semantics<parallel>], iteration_bounds = array<i64: 8>, scalar_prefetch = 0 : i64, scratch_operands = 1 : i64, tpu.core_type = #tpu.core_type<tc>, window_params = [{}, {}]} {
    %c0_i32 = arith.constant 0 : i32
    %0 = tpu.memref_slice %arg1[%arg0, %c0_i32] : memref<8x64xf32, #tpu.memory_space<any>> -> memref<1x64xf32, #tpu.memory_space<any>>
    %1 = tpu.memref_squeeze %0 : memref<1x64xf32, #tpu.memory_space<any>> -> memref<64xf32, #tpu.memory_space<any>>
    %c0_i32_0 = arith.constant 0 : i32
    %2 = tpu.memref_slice %arg2[%arg0, %c0_i32_0] : memref<8x64xf32, #tpu.memory_space<any>> -> memref<1x64xf32, #tpu.memory_space<any>>
    %3 = tpu.memref_squeeze %2 : memref<1x64xf32, #tpu.memory_space<any>> -> memref<64xf32, #tpu.memory_space<any>>
    tpu.enqueue_dma source(%1 : memref<64xf32, #tpu.memory_space<any>>) target(%3 : memref<64xf32, #tpu.memory_space<any>>) target_semaphore(%arg3 : memref<!tpu.dma_semaphore, #tpu.memory_space<semaphore_mem>>)
    %c0_i32_1 = arith.constant 0 : i32
    %4 = tpu.memref_slice %arg1[%arg0, %c0_i32_1] : memref<8x64xf32, #tpu.memory_space<any>> -> memref<1x64xf32, #tpu.memory_space<any>>
    %5 = tpu.memref_squeeze %4 : memref<1x64xf32, #tpu.memory_space<any>> -> memref<64xf32, #tpu.memory_space<any>>
    %c0_i32_2 = arith.constant 0 : i32
    %6 = tpu.memref_slice %arg2[%arg0, %c0_i32_2] : memref<8x64xf32, #tpu.memory_space<any>> -> memref<1x64xf32, #tpu.memory_space<any>>
    %7 = tpu.memref_squeeze %6 : memref<1x64xf32, #tpu.memory_space<any>> -> memref<64xf32, #tpu.memory_space<any>>
    tpu.wait_dma2 semaphore(%arg3 : memref<!tpu.dma_semaphore, #tpu.memory_space<semaphore_mem>>) src(%5 : memref<64xf32, #tpu.memory_space<any>>) dst(%7 : memref<64xf32, #tpu.memory_space<any>>)
    return
  }
}

</mosaic_0001>

<llo_original>
// kernel: tpu_custom_call.1
$region0: #{tpu_custom_call.1}
  #allocation0 [shape = 'u32[]', space=smem, size = 0x4, offset = 0x4, fixed_abs, tag = 'smem constant byte address 0x4 - core index']
  #allocation1 [shape = 'u32[144,128]{1,0:T(1,128)}', space=vmem, size = 0x12000, scoped, tag = 'internal scratch']
  #allocation2 [shape = 's32[1]{0}', space=sflag, size = 0x4, scoped, tag = 'scratch operand']
  #allocation3 [shape = 's32[]', space=sflag, size = 0x4, offset = 0, fixed_abs, tag = 'sflag constant byte address 0x0 - dummy sync flag']
  #allocation4 [shape = 'u32[0]{0}', space=smem, size = 0, offset = 0, fixed_abs, tag = 'smem constant byte address 0x0 - null']
  %s0 = inlined_call_operand.hbm [shape: f32[8,64], index: 0, kind: input, shape index: {}]
  %s1 = inlined_call_operand.hbm [shape: f32[8,64], index: 1, kind: output, shape index: {}]
  %s2 = sld [smem:[#allocation0]]
  $region9: #{tpu_custom_call.1} parent=0
    _
  %s4 = ssub.s32 1, %s2
  %s5 = scalar_select 0, %s4, %s2
  loop: start=0, step=1, limit=8
  $region2: #{tpu_custom_call.1} parent=0 // loop_pre_header
    _
  $region3: #{tpu_custom_call.1} parent=0 // loop_header
    %s7 = sphi 0, %s11
    %p8 = scmp.ge.s32.totalorder %s7, 8
  $region4: #{tpu_custom_call.1} parent=0 // loop_header_branch
    %10 = sbr.rel (%p8) target = $region8
  $region5: #{tpu_custom_call.1} parent=0 // loop_body
    %s12 = sadd.s32 %s7, 1
    %s13 = smul.addr %s7, 16
    %s14 = scalar_lea.hbm %s0, %s13
    %s15 = smul.addr %s7, 16
    %s16 = scalar_lea.hbm %s1, %s15
    %s18 = sshll.u32 1, 14
    %s19 = sxor.u32 4294967295, %s18
    %s22 = sshll.u32 3, 24
    %s23 = sxor.u32 4294967295, %s22
    %s24 = sand.u32 0, %s23
    %s26 = sor.u32 %s24, 0
    %29 = dma.general %s14, 16, %s16, [#allocation2], [#allocation3], [#allocation4], %s26, 0
    %31 = dma.done [#allocation2], 16
  $region6: #{tpu_custom_call.1} parent=0 // loop_footer
    %s11 = sadd.s32 1, %s7
  $region7: #{tpu_custom_call.1} parent=0 // loop_footer_branch
    %6 = sbr.rel target = $region3
  $region8: #{tpu_custom_call.1} parent=0 // loop_exit
    _
  %32 = vsyncmov [#allocation2]
  %s33 = vpop.sfrf %32
  %p34 = scmp.eq.s32.totalorder %s33, 0
  %p35 = pneg %p34
  %37 = shalt.err (%p35)

</llo_original>
